<compile_context>
chip_gen: v5e
topology: v5e:2x2
jax: 0.10.0
libtpu: 0.0.40
codegen_flags: <defaults>
</compile_context>

<pallas_src>
import functools
import math

import numpy as np
import jax
import jax.numpy as jnp
from jax.experimental import pallas as pl
from jax.experimental.pallas import tpu as pltpu

NUM_HEADS = 8  # fixed by nn.MultiheadAttention(embed_dim=hidden_size, num_heads=8)


def _erf(x):
    # Abramowitz & Stegun 7.1.26, |abs err| <= 1.5e-7; uses only exp/select so it always
    # lowers in Mosaic (no dependence on an erf primitive lowering rule).
    a1, a2, a3, a4, a5 = 0.254829592, -0.284496736, 1.421413741, -1.453152027, 1.061405429
    p = 0.3275911
    ax = jnp.abs(x)
    t = 1.0 / (1.0 + p * ax)
    poly = ((((a5 * t + a4) * t + a3) * t + a2) * t + a1) * t
    y = 1.0 - poly * jnp.exp(-ax * ax)
    return jnp.where(x < 0, -y, y)


def _gelu_exact(x):
    return 0.5 * x * (1.0 + _erf(x * 0.7071067811865476))


def _offset_predictor_kernel(skel_ref, llm_ref, wq_ref, bq_ref, wk_ref, bk_ref,
                             colmask_ref, seg_ref, w1_ref, b1_ref, w2_ref, b2_ref,
                             out_ref, *, num_heads):
    bb, lq, hidden = skel_ref.shape          # (BB, Lq, H)  bf16
    _, lk, _ = llm_ref.shape                 # (BB, Lk, H)  bf16
    jdim = num_heads * lk                    # packed (head, key) lane axis
    inv_heads = 1.0 / num_heads

    skel = skel_ref[...]                     # (bb, lq, H) bf16
    llm = llm_ref[...]                       # (bb, lk, H) bf16

    # --- MHA in-projection: batch folded into MXU rows; softmax scale pre-folded into Wq/bq ---
    q = jnp.dot(skel.reshape(bb * lq, hidden), wq_ref[...],
                preferred_element_type=jnp.float32) + bq_ref[...]          # (bb*lq, H) f32
    q_bf = q.astype(jnp.bfloat16).reshape(bb, lq, hidden)
    k = jnp.dot(llm.reshape(bb * lk, hidden), wk_ref[...],
                preferred_element_type=jnp.float32) + bk_ref[...]          # (bb*lk, H) f32
    k3 = k.reshape(bb, lk, hidden)

    # --- key-0 shift (exact): s_hk - s_h0 = Q_h . (K_k - K_0) ---
    kd = (k3 - k3[:, 0:1, :]).astype(jnp.bfloat16)                         # (bb, lk, H) bf16

    # --- block-diagonal key slab, built in bf16 in one broadcast-multiply ---
    # kbd[b, h*lk + k, d] = (K[b,k,d]-K[b,0,d]) if d is in head h's slice else 0
    kbd = (kd[:, None, :, :] * colmask_ref[...][None, :, None, :]
           ).reshape(bb, jdim, hidden)                                     # (bb, jdim, H) bf16

    # One lane-dense batched matmul gives every head's (shifted) scores.
    s = jnp.einsum('bqd,bjd->bqj', q_bf, kbd,
                   preferred_element_type=jnp.float32)                     # (bb, lq, jdim) f32
    e = jnp.exp(s).reshape(bb * lq, jdim)    # key-0 term is exp(0)=1 -> denom >= 1 always

    # Segmented per-head denominator via one constant-selector matmul (MXU, lane-dense input).
    denom = jnp.dot(e, seg_ref[...], preferred_element_type=jnp.float32)   # (bb*lq, nh)
    # attn weight of each query on key 0, averaged over heads (never Inf/NaN: denom >= 1).
    w = jnp.sum(pl.reciprocal(denom, approx=True), axis=-1, keepdims=True) * inv_heads
    w3 = w.reshape(bb, lq, 1)                                              # (bb, lq, 1) f32

    # --- pooling: VPU broadcast-multiply + XLU sublane reduce (no tiny M=1 matmuls) ---
    pooled = jnp.sum(w3 * skel, axis=1)                                    # (bb, H) f32

    # --- MLP head: Linear(H,2H) -> exact GELU -> Linear(2H,2) -> ReLU (dropout = identity) ---
    h1 = jnp.dot(pooled.astype(jnp.bfloat16), w1_ref[...],
                 preferred_element_type=jnp.float32) + b1_ref[...]         # (bb, 2H) f32
    h1 = _gelu_exact(h1)
    o = jnp.einsum('oh,bh->ob', w2_ref[...], h1,
                   preferred_element_type=jnp.float32) + b2_ref[...]       # (2, bb) lane-dense
    out_ref[0] = jnp.maximum(o, 0.0)                                       # final F.relu


def prepare_params(params, *, num_heads=NUM_HEADS, mxu_dtype=jnp.bfloat16):
    """Hoist weight transposes / casts / the softmax scale out of the per-call path."""
    hidden = params["wq"].shape[0]
    scale = 1.0 / math.sqrt(hidden // num_heads)
    return dict(
        wq_t=jnp.asarray(params["wq"].T * scale, mxu_dtype),   # (H, H), scale folded in
        bq=jnp.asarray(params["bq"] * scale, jnp.float32)[None, :],
        wk_t=jnp.asarray(params["wk"].T, mxu_dtype),            # (H, H)
        bk=jnp.asarray(params["bk"], jnp.float32)[None, :],
        w1_t=jnp.asarray(params["w1"].T, mxu_dtype),             # (H, 2H)
        b1=jnp.asarray(params["b1"], jnp.float32)[None, :],
        w2=jnp.asarray(params["w2"], jnp.float32),               # (2, 2H)
        b2=jnp.asarray(params["b2"], jnp.float32)[:, None],      # (2, 1)
    )


def _pick_block_b(batch, lk, hidden, num_heads):
    """Batch elements per grid step.

    Targets ~64 batch rows/step (amortizes ~0.35us step overhead, fills MXU M rows),
    caps bb so the bf16 block-diagonal key slab stays small (safe on v7x's 64 MiB VMEM),
    and prefers a divisor of `batch` so the wrapper never has to jnp.pad the full inputs.
    No forced ">=2 steps" split (it only hurts single-TC v5e/v6e).
    """
    slab_bytes = num_heads * lk * hidden * 2          # kbd in bf16, per batch element
    cap = max(1, (4 << 20) // max(1, slab_bytes))
    target = max(1, min(batch, 64, cap))
    best = 1
    for bb in range(target, 0, -1):
        if batch % bb == 0:
            best = bb
            break
    if best * 4 >= target:                             # good divisor found -> no padding
        return best, False
    return target, True                                # ragged batch (rare): pad in wrapper


def offset_predictor_forward(llm_hidden_states, skeleton_features, prepared,
                             *, num_heads=NUM_HEADS, block_b=None):
    B, Lk, H = llm_hidden_states.shape
    Bs, Lq, Hs = skeleton_features.shape
    assert Bs == B and Hs == H and H % num_heads == 0
    dh = H // num_heads
    jdim = num_heads * Lk

    # bf16 at the HBM boundary halves the dominant input DMA; accumulation stays f32.
    skel = skeleton_features.astype(jnp.bfloat16)
    llm = llm_hidden_states.astype(jnp.bfloat16)

    if block_b is None:
        bb, need_pad = _pick_block_b(B, Lk, H, num_heads)
    else:
        bb, need_pad = block_b, (B % block_b != 0)
    nblk = pl.cdiv(B, bb)
    b_pad = nblk * bb
    if need_pad and b_pad != B:
        pad = [(0, b_pad - B), (0, 0), (0, 0)]
        skel = jnp.pad(skel, pad)
        llm = jnp.pad(llm, pad)

    # Host-built constants (no per-grid-step iota/compare work inside the kernel).
    colmask = np.zeros((num_heads, H), np.float32)
    for h in range(num_heads):
        colmask[h, h * dh:(h + 1) * dh] = 1.0
    colmask = jnp.asarray(colmask, jnp.bfloat16)                       # (nh, H)
    seg = jnp.asarray(np.repeat(np.eye(num_heads, dtype=np.float32), Lk, axis=0))  # (jdim, nh)

    n_out = prepared["w2"].shape[0]                                    # 2
    kernel = functools.partial(_offset_predictor_kernel, num_heads=num_heads)

    out = pl.pallas_call(
        kernel,
        out_shape=jax.ShapeDtypeStruct((nblk, n_out, bb), jnp.float32),
        grid=(nblk,),
        in_specs=[
            pl.BlockSpec((bb, Lq, H), lambda g: (g, 0, 0)),            # skeleton_features (bf16)
            pl.BlockSpec((bb, Lk, H), lambda g: (g, 0, 0)),            # llm_hidden_states (bf16)
            pl.BlockSpec((H, H), lambda g: (0, 0)),                    # Wq^T * scale (bf16)
            pl.BlockSpec((1, H), lambda g: (0, 0)),                    # bq * scale
            pl.BlockSpec((H, H), lambda g: (0, 0)),                    # Wk^T (bf16)
            pl.BlockSpec((1, H), lambda g: (0, 0)),                    # bk
            pl.BlockSpec((num_heads, H), lambda g: (0, 0)),            # per-head column mask (bf16)
            pl.BlockSpec((jdim, num_heads), lambda g: (0, 0)),         # segment selector (f32)
            pl.BlockSpec((H, 2 * H), lambda g: (0, 0)),                # W1^T (bf16)
            pl.BlockSpec((1, 2 * H), lambda g: (0, 0)),                # b1
            pl.BlockSpec((n_out, 2 * H), lambda g: (0, 0)),            # W2 (f32)
            pl.BlockSpec((n_out, 1), lambda g: (0, 0)),                # b2
        ],
        out_specs=pl.BlockSpec((1, n_out, bb), lambda g: (g, 0, 0)),
        compiler_params=pltpu.CompilerParams(
            dimension_semantics=("parallel",),
            vmem_limit_bytes=32 << 20),
    )(skel, llm,
      prepared["wq_t"], prepared["bq"], prepared["wk_t"], prepared["bk"],
      colmask, seg,
      prepared["w1_t"], prepared["b1"], prepared["w2"], prepared["b2"])

    # (nblk, 2, bb) lane-dense blocks -> (B, 2)
    out = jnp.transpose(out, (0, 2, 1)).reshape(b_pad, n_out)
    return out[:B]


def reference_forward(llm, skel, params, *, num_heads=NUM_HEADS):
    """Pure-JAX reference matching the PyTorch forward (eval mode)."""
    B, Lk, H = llm.shape
    _, Lq, _ = skel.shape
    dh = H // num_heads
    q = skel @ params["wq"].T + params["bq"]
    k = llm @ params["wk"].T + params["bk"]
    qh = q.reshape(B, Lq, num_heads, dh).transpose(0, 2, 1, 3)
    kh = k.reshape(B, Lk, num_heads, dh).transpose(0, 2, 1, 3)
    s = jnp.einsum('bhqd,bhkd->bhqk', qh, kh) / math.sqrt(dh)
    attn = jax.nn.softmax(s, axis=-1).mean(axis=1)               # (B, Lq, Lk), avg over heads
    w = attn[:, :, 0]                                            # (B, Lq)
    pooled = jnp.einsum('bq,bqh->bh', w, skel)                   # (B, H)
    h1 = jax.nn.gelu(pooled @ params["w1"].T + params["b1"], approximate=False)
    out = h1 @ params["w2"].T + params["b2"]
    return jnp.maximum(out, 0.0)


if __name__ == "__main__":
    B, Lq, Lk, H = 2, 8, 16, 128          # batch, skeleton seq, llm seq, hidden
    key = jax.random.PRNGKey(0)
    ks = jax.random.split(key, 10)

    llm_hidden_states = jax.random.normal(ks[0], (B, Lk, H), jnp.float32)
    skeleton_features = jax.random.normal(ks[1], (B, Lq, H), jnp.float32)

    # Deterministic synthetic parameters (shapes from the module's __init__).
    params = dict(
        wq=jax.random.normal(ks[2], (H, H), jnp.float32) * 0.05,        # in_proj (Q slice)
        bq=jax.random.normal(ks[3], (H,), jnp.float32) * 0.05,
        wk=jax.random.normal(ks[4], (H, H), jnp.float32) * 0.05,        # in_proj (K slice)
        bk=jax.random.normal(ks[5], (H,), jnp.float32) * 0.05,
        w1=jax.random.normal(ks[6], (2 * H, H), jnp.float32) * 0.05,    # mlp.Linear(H, 2H)
        b1=jax.random.normal(ks[7], (2 * H,), jnp.float32) * 0.05,
        w2=jax.random.normal(ks[8], (2, 2 * H), jnp.float32) * 0.05,    # mlp.Linear(2H, 2)
        b2=jax.random.normal(ks[9], (2,), jnp.float32) * 0.05,
    )
    # TODO(synk): dropout layers are identity here (eval mode); training-mode dropout would
    # need pltpu PRNG and is intentionally omitted for determinism.

    prepared = prepare_params(params)   # transposes / casts / softmax scale hoisted out
    out = jax.block_until_ready(offset_predictor_forward(
        llm_hidden_states, skeleton_features, prepared))
    ref = reference_forward(llm_hidden_states, skeleton_features, params)

    assert out.shape == (B, 2), out.shape
    err = float(jnp.max(jnp.abs(out - ref)))
    assert err < 5e-2, f"kernel/reference mismatch: {err}"
    print("KERNEL_OK")
</pallas_src>

<mosaic_0001>
module attributes {stable_mosaic.version = 11 : i64} {
  func.func @_offset_predictor_kernel(%arg0: i32, %arg1: memref<2x8x128xbf16, #tpu.memory_space<vmem>>, %arg2: memref<2x16x128xbf16, #tpu.memory_space<vmem>>, %arg3: memref<128x128xbf16, #tpu.memory_space<vmem>>, %arg4: memref<1x128xf32, #tpu.memory_space<vmem>>, %arg5: memref<128x128xbf16, #tpu.memory_space<vmem>>, %arg6: memref<1x128xf32, #tpu.memory_space<vmem>>, %arg7: memref<8x128xbf16, #tpu.memory_space<vmem>>, %arg8: memref<128x8xf32, #tpu.memory_space<vmem>>, %arg9: memref<128x256xbf16, #tpu.memory_space<vmem>>, %arg10: memref<1x256xf32, #tpu.memory_space<vmem>>, %arg11: memref<2x256xf32, #tpu.memory_space<vmem>>, %arg12: memref<2x1xf32, #tpu.memory_space<vmem>>, %arg13: memref<1x2x2xf32, #tpu.memory_space<vmem>>) attributes {dimension_semantics = [#tpu.dimension_semantics<parallel>], iteration_bounds = array<i64: 1>, scalar_prefetch = 0 : i64, scratch_operands = 0 : i64, tpu.core_type = #tpu.core_type<tc>, window_params = [{transform_indices = @transform_0, window_bounds = array<i64: 2, 8, 128>}, {transform_indices = @transform_1, window_bounds = array<i64: 2, 16, 128>}, {pipeline_mode = #tpu.pipeline_mode<synchronous>, transform_indices = @transform_2, window_bounds = array<i64: 128, 128>}, {pipeline_mode = #tpu.pipeline_mode<synchronous>, transform_indices = @transform_3, window_bounds = array<i64: 1, 128>}, {pipeline_mode = #tpu.pipeline_mode<synchronous>, transform_indices = @transform_4, window_bounds = array<i64: 128, 128>}, {pipeline_mode = #tpu.pipeline_mode<synchronous>, transform_indices = @transform_5, window_bounds = array<i64: 1, 128>}, {pipeline_mode = #tpu.pipeline_mode<synchronous>, transform_indices = @transform_6, window_bounds = array<i64: 8, 128>}, {pipeline_mode = #tpu.pipeline_mode<synchronous>, transform_indices = @transform_7, window_bounds = array<i64: 128, 8>}, {pipeline_mode = #tpu.pipeline_mode<synchronous>, transform_indices = @transform_8, window_bounds = array<i64: 128, 256>}, {pipeline_mode = #tpu.pipeline_mode<synchronous>, transform_indices = @transform_9, window_bounds = array<i64: 1, 256>}, {pipeline_mode = #tpu.pipeline_mode<synchronous>, transform_indices = @transform_10, window_bounds = array<i64: 2, 256>}, {pipeline_mode = #tpu.pipeline_mode<synchronous>, transform_indices = @transform_11, window_bounds = array<i64: 2, 1>}, {transform_indices = @transform_12, window_bounds = array<i64: 1, 2, 2>}]} {
    %c0 = arith.constant 0 : index
    %c0_0 = arith.constant 0 : index
    %c0_1 = arith.constant 0 : index
    %0 = vector.load %arg1[%c0, %c0_0, %c0_1] : memref<2x8x128xbf16, #tpu.memory_space<vmem>>, vector<2x8x128xbf16>
    %c0_2 = arith.constant 0 : index
    %c0_3 = arith.constant 0 : index
    %c0_4 = arith.constant 0 : index
    %1 = vector.load %arg2[%c0_2, %c0_3, %c0_4] : memref<2x16x128xbf16, #tpu.memory_space<vmem>>, vector<2x16x128xbf16>
    %2 = vector.shape_cast %0 : vector<2x8x128xbf16> to vector<16x128xbf16>
    %c0_5 = arith.constant 0 : index
    %c0_6 = arith.constant 0 : index
    %3 = vector.load %arg3[%c0_5, %c0_6] : memref<128x128xbf16, #tpu.memory_space<vmem>>, vector<128x128xbf16>
    %cst = arith.constant dense<0.000000e+00> : vector<16x128xf32>
    %4 = tpu.matmul %2, %3, %cst {dimension_numbers = #tpu.dot_dimension_numbers<[1], [0], [0], [1], [0, 0, 1, 1], [], []>} : vector<16x128xbf16>, vector<128x128xbf16>, vector<16x128xf32> -> vector<16x128xf32>
    %c0_7 = arith.constant 0 : index
    %c0_8 = arith.constant 0 : index
    %5 = vector.load %arg4[%c0_7, %c0_8] : memref<1x128xf32, #tpu.memory_space<vmem>>, vector<1x128xf32>
    %6 = vector.broadcast %5 : vector<1x128xf32> to vector<16x128xf32>
    %7 = arith.addf %4, %6 : vector<16x128xf32>
    %8 = arith.truncf %7 : vector<16x128xf32> to vector<16x128xbf16>
    %9 = vector.shape_cast %8 : vector<16x128xbf16> to vector<2x8x128xbf16>
    %10 = vector.shape_cast %1 : vector<2x16x128xbf16> to vector<32x128xbf16>
    %c0_9 = arith.constant 0 : index
    %c0_10 = arith.constant 0 : index
    %11 = vector.load %arg5[%c0_9, %c0_10] : memref<128x128xbf16, #tpu.memory_space<vmem>>, vector<128x128xbf16>
    %cst_11 = arith.constant dense<0.000000e+00> : vector<32x128xf32>
    %12 = tpu.matmul %10, %11, %cst_11 {dimension_numbers = #tpu.dot_dimension_numbers<[1], [0], [0], [1], [0, 0, 1, 1], [], []>} : vector<32x128xbf16>, vector<128x128xbf16>, vector<32x128xf32> -> vector<32x128xf32>
    %c0_12 = arith.constant 0 : index
    %c0_13 = arith.constant 0 : index
    %13 = vector.load %arg6[%c0_12, %c0_13] : memref<1x128xf32, #tpu.memory_space<vmem>>, vector<1x128xf32>
    %14 = vector.broadcast %13 : vector<1x128xf32> to vector<32x128xf32>
    %15 = arith.addf %12, %14 : vector<32x128xf32>
    %16 = vector.shape_cast %15 : vector<32x128xf32> to vector<2x16x128xf32>
    %17 = vector.extract_strided_slice %16 {offsets = [0, 0, 0], sizes = [2, 1, 128], strides = [1, 1, 1]} : vector<2x16x128xf32> to vector<2x1x128xf32>
    %18 = vector.broadcast %17 : vector<2x1x128xf32> to vector<2x16x128xf32>
    %19 = arith.subf %16, %18 : vector<2x16x128xf32>
    %20 = arith.truncf %19 : vector<2x16x128xf32> to vector<2x16x128xbf16>
    %21 = vector.shape_cast %20 : vector<2x16x128xbf16> to vector<2x1x16x128xbf16>
    %c0_14 = arith.constant 0 : index
    %c0_15 = arith.constant 0 : index
    %22 = vector.load %arg7[%c0_14, %c0_15] : memref<8x128xbf16, #tpu.memory_space<vmem>>, vector<8x128xbf16>
    %23 = vector.shape_cast %22 : vector<8x128xbf16> to vector<1x8x1x128xbf16>
    %24 = vector.broadcast %21 : vector<2x1x16x128xbf16> to vector<2x8x16x128xbf16>
    %25 = vector.broadcast %23 : vector<1x8x1x128xbf16> to vector<2x8x16x128xbf16>
    %26 = arith.mulf %24, %25 : vector<2x8x16x128xbf16>
    %27 = vector.shape_cast %26 : vector<2x8x16x128xbf16> to vector<2x128x128xbf16>
    "tpu.trace_start"() <{level = 10 : i32, message = "bqd,bjd->bqj"}> : () -> ()
    %cst_16 = arith.constant dense<0.000000e+00> : vector<2x8x128xf32>
    %28 = tpu.matmul %9, %27, %cst_16 {dimension_numbers = #tpu.dot_dimension_numbers<[2], [2], [1], [1], [0, 0, 0, 1, 1, 1], [0], [0]>} : vector<2x8x128xbf16>, vector<2x128x128xbf16>, vector<2x8x128xf32> -> vector<2x8x128xf32>
    "tpu.trace_stop"() : () -> ()
    %29 = math.exp %28 : vector<2x8x128xf32>
    %30 = vector.shape_cast %29 : vector<2x8x128xf32> to vector<16x128xf32>
    %c0_17 = arith.constant 0 : index
    %c0_18 = arith.constant 0 : index
    %31 = vector.load %arg8[%c0_17, %c0_18] : memref<128x8xf32, #tpu.memory_space<vmem>>, vector<128x8xf32>
    %cst_19 = arith.constant dense<0.000000e+00> : vector<16x8xf32>
    %32 = tpu.matmul %30, %31, %cst_19 {dimension_numbers = #tpu.dot_dimension_numbers<[1], [0], [0], [1], [0, 0, 1, 1], [], []>} : vector<16x128xf32>, vector<128x8xf32>, vector<16x8xf32> -> vector<16x8xf32>
    %33 = tpu.reciprocal %32 {approx = true} : vector<16x8xf32> -> vector<16x8xf32>
    %cst_20 = arith.constant dense<0.000000e+00> : vector<16xf32>
    %34 = vector.multi_reduction <add>, %33, %cst_20 [1] : vector<16x8xf32> to vector<16xf32>
    %35 = vector.shape_cast %34 : vector<16xf32> to vector<16x1xf32>
    %cst_21 = arith.constant 1.250000e-01 : f32
    %36 = vector.broadcast %cst_21 : f32 to vector<16x1xf32>
    %37 = arith.mulf %35, %36 : vector<16x1xf32>
    %38 = vector.shape_cast %37 : vector<16x1xf32> to vector<2x8x1xf32>
    %39 = arith.extf %0 : vector<2x8x128xbf16> to vector<2x8x128xf32>
    %40 = vector.broadcast %38 : vector<2x8x1xf32> to vector<2x8x128xf32>
    %41 = arith.mulf %40, %39 : vector<2x8x128xf32>
    %cst_22 = arith.constant dense<0.000000e+00> : vector<2x128xf32>
    %42 = vector.multi_reduction <add>, %41, %cst_22 [1] : vector<2x8x128xf32> to vector<2x128xf32>
    %43 = arith.truncf %42 : vector<2x128xf32> to vector<2x128xbf16>
    %c0_23 = arith.constant 0 : index
    %c0_24 = arith.constant 0 : index
    %44 = vector.load %arg9[%c0_23, %c0_24] : memref<128x256xbf16, #tpu.memory_space<vmem>>, vector<128x256xbf16>
    %cst_25 = arith.constant dense<0.000000e+00> : vector<2x256xf32>
    %45 = tpu.matmul %43, %44, %cst_25 {dimension_numbers = #tpu.dot_dimension_numbers<[1], [0], [0], [1], [0, 0, 1, 1], [], []>} : vector<2x128xbf16>, vector<128x256xbf16>, vector<2x256xf32> -> vector<2x256xf32>
    %c0_26 = arith.constant 0 : index
    %c0_27 = arith.constant 0 : index
    %46 = vector.load %arg10[%c0_26, %c0_27] : memref<1x256xf32, #tpu.memory_space<vmem>>, vector<1x256xf32>
    %47 = vector.broadcast %46 : vector<1x256xf32> to vector<2x256xf32>
    %48 = arith.addf %45, %47 : vector<2x256xf32>
    %cst_28 = arith.constant 5.000000e-01 : f32
    %49 = vector.broadcast %cst_28 : f32 to vector<2x256xf32>
    %50 = arith.mulf %49, %48 : vector<2x256xf32>
    %cst_29 = arith.constant 0.707106769 : f32
    %51 = vector.broadcast %cst_29 : f32 to vector<2x256xf32>
    %52 = arith.mulf %48, %51 : vector<2x256xf32>
    %53 = math.absf %52 : vector<2x256xf32>
    %cst_30 = arith.constant 0.327591091 : f32
    %54 = vector.broadcast %cst_30 : f32 to vector<2x256xf32>
    %55 = arith.mulf %54, %53 : vector<2x256xf32>
    %cst_31 = arith.constant 1.000000e+00 : f32
    %56 = vector.broadcast %cst_31 : f32 to vector<2x256xf32>
    %57 = arith.addf %56, %55 : vector<2x256xf32>
    %cst_32 = arith.constant 1.000000e+00 : f32
    %58 = vector.broadcast %cst_32 : f32 to vector<2x256xf32>
    %59 = arith.divf %58, %57 : vector<2x256xf32>
    %cst_33 = arith.constant 1.06140542 : f32
    %60 = vector.broadcast %cst_33 : f32 to vector<2x256xf32>
    %61 = arith.mulf %60, %59 : vector<2x256xf32>
    %cst_34 = arith.constant -1.45315206 : f32
    %62 = vector.broadcast %cst_34 : f32 to vector<2x256xf32>
    %63 = arith.addf %61, %62 : vector<2x256xf32>
    %64 = arith.mulf %63, %59 : vector<2x256xf32>
    %cst_35 = arith.constant 1.42141378 : f32
    %65 = vector.broadcast %cst_35 : f32 to vector<2x256xf32>
    %66 = arith.addf %64, %65 : vector<2x256xf32>
    %67 = arith.mulf %66, %59 : vector<2x256xf32>
    %cst_36 = arith.constant -0.284496725 : f32
    %68 = vector.broadcast %cst_36 : f32 to vector<2x256xf32>
    %69 = arith.addf %67, %68 : vector<2x256xf32>
    %70 = arith.mulf %69, %59 : vector<2x256xf32>
    %cst_37 = arith.constant 0.254829586 : f32
    %71 = vector.broadcast %cst_37 : f32 to vector<2x256xf32>
    %72 = arith.addf %70, %71 : vector<2x256xf32>
    %73 = arith.mulf %72, %59 : vector<2x256xf32>
    %cst_38 = arith.constant 0.000000e+00 : f32
    %74 = vector.broadcast %cst_38 : f32 to vector<2x256xf32>
    %75 = arith.subf %74, %53 : vector<2x256xf32>
    %76 = arith.mulf %75, %53 : vector<2x256xf32>
    %77 = math.exp %76 : vector<2x256xf32>
    %78 = arith.mulf %73, %77 : vector<2x256xf32>
    %cst_39 = arith.constant 1.000000e+00 : f32
    %79 = vector.broadcast %cst_39 : f32 to vector<2x256xf32>
    %80 = arith.subf %79, %78 : vector<2x256xf32>
    %cst_40 = arith.constant 0.000000e+00 : f32
    %81 = vector.broadcast %cst_40 : f32 to vector<2x256xf32>
    %82 = arith.cmpf olt, %52, %81 : vector<2x256xf32>
    %cst_41 = arith.constant 0.000000e+00 : f32
    %83 = vector.broadcast %cst_41 : f32 to vector<2x256xf32>
    %84 = arith.subf %83, %80 : vector<2x256xf32>
    %85 = arith.select %82, %84, %80 : vector<2x256xi1>, vector<2x256xf32>
    %cst_42 = arith.constant 1.000000e+00 : f32
    %86 = vector.broadcast %cst_42 : f32 to vector<2x256xf32>
    %87 = arith.addf %86, %85 : vector<2x256xf32>
    %88 = arith.mulf %50, %87 : vector<2x256xf32>
    %c0_43 = arith.constant 0 : index
    %c0_44 = arith.constant 0 : index
    %89 = vector.load %arg11[%c0_43, %c0_44] : memref<2x256xf32, #tpu.memory_space<vmem>>, vector<2x256xf32>
    "tpu.trace_start"() <{level = 10 : i32, message = "oh,bh->ob"}> : () -> ()
    %cst_45 = arith.constant dense<0.000000e+00> : vector<2x2xf32>
    %90 = tpu.matmul %89, %88, %cst_45 {dimension_numbers = #tpu.dot_dimension_numbers<[1], [1], [0], [0], [0, 0, 1, 0], [], []>} : vector<2x256xf32>, vector<2x256xf32>, vector<2x2xf32> -> vector<2x2xf32>
    "tpu.trace_stop"() : () -> ()
    %c0_46 = arith.constant 0 : index
    %c0_47 = arith.constant 0 : index
    %91 = vector.load %arg12[%c0_46, %c0_47] : memref<2x1xf32, #tpu.memory_space<vmem>>, vector<2x1xf32>
    %92 = vector.broadcast %91 : vector<2x1xf32> to vector<2x2xf32>
    %93 = arith.addf %90, %92 : vector<2x2xf32>
    %cst_48 = arith.constant 0.000000e+00 : f32
    %94 = vector.broadcast %cst_48 : f32 to vector<2x2xf32>
    %95 = arith.maximumf %93, %94 : vector<2x2xf32>
    %c0_49 = arith.constant 0 : index
    %c0_50 = arith.constant 0 : index
    %c0_51 = arith.constant 0 : index
    %96 = vector.load %arg13[%c0_49, %c0_50, %c0_51] : memref<1x2x2xf32, #tpu.memory_space<vmem>>, vector<1x2x2xf32>
    %97 = vector.shape_cast %96 : vector<1x2x2xf32> to vector<2x2xf32>
    %98 = vector.shape_cast %95 : vector<2x2xf32> to vector<1x2x2xf32>
    tpu.vector_store %arg13[%c0_49, %c0_50, %c0_51], %98 {strides = array<i32>} : memref<1x2x2xf32, #tpu.memory_space<vmem>>, vector<1x2x2xf32>,
    return
  }
  func.func @transform_0(%arg0: i32) -> (i32, i32, i32) {
    %c0_i32 = arith.constant 0 : i32
    %c0_i32_0 = arith.constant 0 : i32
    %c0_i32_1 = arith.constant 0 : i32
    return %arg0, %c0_i32, %c0_i32_0 : i32, i32, i32
  }
  func.func @transform_1(%arg0: i32) -> (i32, i32, i32) {
    %c0_i32 = arith.constant 0 : i32
    %c0_i32_0 = arith.constant 0 : i32
    %c0_i32_1 = arith.constant 0 : i32
    return %arg0, %c0_i32, %c0_i32_0 : i32, i32, i32
  }
  func.func @transform_2(%arg0: i32) -> (i32, i32) {
    %c0_i32 = arith.constant 0 : i32
    %c0_i32_0 = arith.constant 0 : i32
    %c0_i32_1 = arith.constant 0 : i32
    return %c0_i32, %c0_i32_0 : i32, i32
  }
  func.func @transform_3(%arg0: i32) -> (i32, i32) {
    %c0_i32 = arith.constant 0 : i32
    %c0_i32_0 = arith.constant 0 : i32
    %c0_i32_1 = arith.constant 0 : i32
    return %c0_i32, %c0_i32_0 : i32, i32
  }
  func.func @transform_4(%arg0: i32) -> (i32, i32) {
    %c0_i32 = arith.constant 0 : i32
    %c0_i32_0 = arith.constant 0 : i32
    %c0_i32_1 = arith.constant 0 : i32
    return %c0_i32, %c0_i32_0 : i32, i32
  }
  func.func @transform_5(%arg0: i32) -> (i32, i32) {
    %c0_i32 = arith.constant 0 : i32
    %c0_i32_0 = arith.constant 0 : i32
    %c0_i32_1 = arith.constant 0 : i32
    return %c0_i32, %c0_i32_0 : i32, i32
  }
  func.func @transform_6(%arg0: i32) -> (i32, i32) {
    %c0_i32 = arith.constant 0 : i32
    %c0_i32_0 = arith.constant 0 : i32
    %c0_i32_1 = arith.constant 0 : i32
    return %c0_i32, %c0_i32_0 : i32, i32
  }
  func.func @transform_7(%arg0: i32) -> (i32, i32) {
    %c0_i32 = arith.constant 0 : i32
    %c0_i32_0 = arith.constant 0 : i32
    %c0_i32_1 = arith.constant 0 : i32
    return %c0_i32, %c0_i32_0 : i32, i32
  }
  func.func @transform_8(%arg0: i32) -> (i32, i32) {
    %c0_i32 = arith.constant 0 : i32
    %c0_i32_0 = arith.constant 0 : i32
    %c0_i32_1 = arith.constant 0 : i32
    return %c0_i32, %c0_i32_0 : i32, i32
  }
  func.func @transform_9(%arg0: i32) -> (i32, i32) {
    %c0_i32 = arith.constant 0 : i32
    %c0_i32_0 = arith.constant 0 : i32
    %c0_i32_1 = arith.constant 0 : i32
    return %c0_i32, %c0_i32_0 : i32, i32
  }
  func.func @transform_10(%arg0: i32) -> (i32, i32) {
    %c0_i32 = arith.constant 0 : i32
    %c0_i32_0 = arith.constant 0 : i32
    %c0_i32_1 = arith.constant 0 : i32
    return %c0_i32, %c0_i32_0 : i32, i32
  }
  func.func @transform_11(%arg0: i32) -> (i32, i32) {
    %c0_i32 = arith.constant 0 : i32
    %c0_i32_0 = arith.constant 0 : i32
    %c0_i32_1 = arith.constant 0 : i32
    return %c0_i32, %c0_i32_0 : i32, i32
  }
  func.func @transform_12(%arg0: i32) -> (i32, i32, i32) {
    %c0_i32 = arith.constant 0 : i32
    %c0_i32_0 = arith.constant 0 : i32
    %c0_i32_1 = arith.constant 0 : i32
    return %arg0, %c0_i32, %c0_i32_0 : i32, i32, i32
  }
}

</mosaic_0001>

<llo_original>
// kernel: tpu_custom_call.1
$region0: #{tpu_custom_call.1}
  #allocation0 [shape = 'u32[]', space=smem, size = 0x4, offset = 0x4, fixed_abs, tag = 'smem constant byte address 0x4 - core index']
  #allocation1 [shape = 'u32[72,128]{1,0:T(1,128)}', space=vmem, size = 0x9000, scoped, tag = 'internal scratch']
  %s0 = inlined_call_operand.vmem [shape: bf16[2,8,128], index: 0, kind: input, shape index: {}]
  %s1 = inlined_call_operand.hbm [shape: bf16[2,16,128], index: 1, kind: input, shape index: {}]
  %s2 = inlined_call_operand.hbm [shape: bf16[128,128], index: 2, kind: input, shape index: {}]
  %s3 = inlined_call_operand.vmem [shape: f32[1,128], index: 3, kind: input, shape index: {}]
  %s4 = inlined_call_operand.hbm [shape: bf16[128,128], index: 4, kind: input, shape index: {}]
  %s5 = inlined_call_operand.hbm [shape: f32[1,128], index: 5, kind: input, shape index: {}]
  %s6 = inlined_call_operand.hbm [shape: bf16[8,128], index: 6, kind: input, shape index: {}]
  %s7 = inlined_call_operand.vmem [shape: f32[128,8], index: 7, kind: input, shape index: {}]
  %s8 = inlined_call_operand.vmem [shape: bf16[128,256], index: 8, kind: input, shape index: {}]
  %s9 = inlined_call_operand.hbm [shape: f32[1,256], index: 9, kind: input, shape index: {}]
  %s10 = inlined_call_operand.hbm [shape: f32[2,256], index: 10, kind: input, shape index: {}]
  %s11 = inlined_call_operand.vmem [shape: f32[2,1], index: 11, kind: input, shape index: {}]
  %s12 = inlined_call_operand.hbm [shape: f32[1,2,2], index: 12, kind: output, shape index: {}]
  %s13 = sld [smem:[#allocation0]]
  $region86: #{tpu_custom_call.1} parent=0
    _
  %s15 = ssub.s32 1, %s13
  %s16 = scalar_select 0, %s15, %s13
  $region1: #{tpu_custom_call.1} parent=0
    #allocation2 [shape = 'u8[8192]{0}', space=vmem, size = 0x2000, scoped, tag = 'input window, operand 1, single buffered']
    #allocation3 [shape = 's32[1]{0}', space=sflag, size = 0x4, scoped, tag = 'scoped memory for tpu_custom_call.1']
    #allocation4 [shape = 's32[1]{0}', space=sflag, size = 0x4, scoped, tag = 'scoped memory for tpu_custom_call.1']
    #allocation5 [shape = 'u8[32768]{0}', space=vmem, size = 0x8000, scoped, tag = 'input window, operand 2, single buffered']
    #allocation6 [shape = 's32[1]{0}', space=sflag, size = 0x4, scoped, tag = 'scoped memory for tpu_custom_call.1']
    #allocation7 [shape = 'u8[32768]{0}', space=vmem, size = 0x8000, scoped, tag = 'input window, operand 4, single buffered']
    #allocation8 [shape = 'u8[512]{0}', space=vmem, size = 0x400, scoped, tag = 'input window, operand 5, single buffered']
    #allocation9 [shape = 's32[1]{0}', space=sflag, size = 0x4, scoped, tag = 'scoped memory for tpu_custom_call.1']
    #allocation10 [shape = 'u8[2048]{0}', space=vmem, size = 0x800, scoped, tag = 'input window, operand 6, single buffered']
    #allocation11 [shape = 'u8[1024]{0}', space=vmem, size = 0x400, scoped, tag = 'input window, operand 9, single buffered']
    #allocation12 [shape = 's32[1]{0}', space=sflag, size = 0x4, scoped, tag = 'scoped memory for tpu_custom_call.1']
    #allocation13 [shape = 'u8[2048]{0}', space=vmem, size = 0x800, scoped, tag = 'input window, operand 10, single buffered']
    #allocation14 [shape = 'u8[1024]{0}', space=vmem, size = 0x400, scoped, tag = 'output window, operand 0, single buffered']
    %17 = vsyncpa [#allocation3], 0
    %18 = vsyncpa [#allocation6], 0
    %19 = vsyncpa [#allocation9], 0
    %20 = vsyncpa [#allocation12], 0
    %21 = vsyncpa [#allocation4], 0
    // Predicated region
    $region2: #{tpu_custom_call.1} parent=1 // pred_check
      _
    $region3: #{tpu_custom_call.1} parent=1 // pred_check_branch
      %23 = sbr.rel (0) target = $region5
    $region4: #{tpu_custom_call.1} parent=1 // pred_region
      _
    $region5: #{tpu_custom_call.1} parent=1 // pred_fallthru
      _
    // Predicated region
    $region6: #{tpu_custom_call.1} parent=1 // pred_check
      _
    $region7: #{tpu_custom_call.1} parent=1 // pred_check_branch
      %25 = sbr.rel (0) target = $region9
    $region8: #{tpu_custom_call.1} parent=1 // pred_region
      %27 = vsyncadd [#allocation3], 0
      %s28 = sshll.u32 %s1, 4
      %s29 = int_to_ptr.hbm [resolvable:$true] %s28
      %s30 = sshll.u32 [#allocation2], 4
      %s31 = int_to_ptr.vmem [resolvable:$true] %s30
      %36 = dma.hbm_to_vmem [thread:$0]  %s29, 256, %s31, [#allocation3], 64, 64, 4
    $region9: #{tpu_custom_call.1} parent=1 // pred_fallthru
      _
    // Predicated region
    $region10: #{tpu_custom_call.1} parent=1 // pred_check
      _
    $region11: #{tpu_custom_call.1} parent=1 // pred_check_branch
      %38 = sbr.rel (0) target = $region13
    $region12: #{tpu_custom_call.1} parent=1 // pred_region
      %40 = vsyncadd [#allocation6], 0
      %s41 = sshll.u32 %s2, 4
      %s42 = int_to_ptr.hbm [resolvable:$true] %s41
      %s43 = sshll.u32 [#allocation5], 4
      %s44 = int_to_ptr.vmem [resolvable:$true] %s43
      %49 = dma.hbm_to_vmem [thread:$0]  %s42, 1024, %s44, [#allocation6], 64, 64, 4
    $region13: #{tpu_custom_call.1} parent=1 // pred_fallthru
      _
    // Predicated region
    $region14: #{tpu_custom_call.1} parent=1 // pred_check
      _
    $region15: #{tpu_custom_call.1} parent=1 // pred_check_branch
      %51 = sbr.rel (0) target = $region17
    $region16: #{tpu_custom_call.1} parent=1 // pred_region
      _
    $region17: #{tpu_custom_call.1} parent=1 // pred_fallthru
      _
    // Predicated region
    $region18: #{tpu_custom_call.1} parent=1 // pred_check
      _
    $region19: #{tpu_custom_call.1} parent=1 // pred_check_branch
      %53 = sbr.rel (0) target = $region21
    $region20: #{tpu_custom_call.1} parent=1 // pred_region
      %55 = vsyncadd [#allocation6], 0
      %s56 = sshll.u32 %s4, 4
      %s57 = int_to_ptr.hbm [resolvable:$true] %s56
      %s58 = sshll.u32 [#allocation7], 4
      %s59 = int_to_ptr.vmem [resolvable:$true] %s58
      %64 = dma.hbm_to_vmem [thread:$0]  %s57, 1024, %s59, [#allocation6], 64, 64, 4
    $region21: #{tpu_custom_call.1} parent=1 // pred_fallthru
      _
    // Predicated region
    $region22: #{tpu_custom_call.1} parent=1 // pred_check
      _
    $region23: #{tpu_custom_call.1} parent=1 // pred_check_branch
      %66 = sbr.rel (0) target = $region25
    $region24: #{tpu_custom_call.1} parent=1 // pred_region
      %68 = vsyncadd [#allocation9], 0
      %s70 = sshll.u32 %s5, 4
      %s71 = int_to_ptr.hbm [resolvable:$true] %s70
      %s72 = sshll.u32 [#allocation8], 4
      %s73 = int_to_ptr.vmem [resolvable:$true] %s72
      %75 = dma.hbm_to_vmem [thread:$0]  %s71, 16, %s73, [#allocation9]
    $region25: #{tpu_custom_call.1} parent=1 // pred_fallthru
      _
    // Predicated region
    $region26: #{tpu_custom_call.1} parent=1 // pred_check
      _
    $region27: #{tpu_custom_call.1} parent=1 // pred_check_branch
      %77 = sbr.rel (0) target = $region29
    $region28: #{tpu_custom_call.1} parent=1 // pred_region
      %79 = vsyncadd [#allocation9], 0
      %s81 = sshll.u32 %s6, 4
      %s82 = int_to_ptr.hbm [resolvable:$true] %s81
      %s83 = sshll.u32 [#allocation10], 4
      %s84 = int_to_ptr.vmem [resolvable:$true] %s83
      %86 = dma.hbm_to_vmem [thread:$0]  %s82, 64, %s84, [#allocation9]
    $region29: #{tpu_custom_call.1} parent=1 // pred_fallthru
      _
    // Predicated region
    $region30: #{tpu_custom_call.1} parent=1 // pred_check
      _
    $region31: #{tpu_custom_call.1} parent=1 // pred_check_branch
      %88 = sbr.rel (0) target = $region33
    $region32: #{tpu_custom_call.1} parent=1 // pred_region
      _
    $region33: #{tpu_custom_call.1} parent=1 // pred_fallthru
      _
    // Predicated region
    $region34: #{tpu_custom_call.1} parent=1 // pred_check
      _
    $region35: #{tpu_custom_call.1} parent=1 // pred_check_branch
      %90 = sbr.rel (0) target = $region37
    $region36: #{tpu_custom_call.1} parent=1 // pred_region
      _
    $region37: #{tpu_custom_call.1} parent=1 // pred_fallthru
      _
    // Predicated region
    $region38: #{tpu_custom_call.1} parent=1 // pred_check
      _
    $region39: #{tpu_custom_call.1} parent=1 // pred_check_branch
      %92 = sbr.rel (0) target = $region41
    $region40: #{tpu_custom_call.1} parent=1 // pred_region
      %94 = vsyncadd [#allocation12], 0
      %s96 = sshll.u32 %s9, 4
      %s97 = int_to_ptr.hbm [resolvable:$true] %s96
      %s98 = sshll.u32 [#allocation11], 4
      %s99 = int_to_ptr.vmem [resolvable:$true] %s98
      %101 = dma.hbm_to_vmem [thread:$0]  %s97, 32, %s99, [#allocation12]
    $region41: #{tpu_custom_call.1} parent=1 // pred_fallthru
      _
    // Predicated region
    $region42: #{tpu_custom_call.1} parent=1 // pred_check
      _
    $region43: #{tpu_custom_call.1} parent=1 // pred_check_branch
      %103 = sbr.rel (0) target = $region45
    $region44: #{tpu_custom_call.1} parent=1 // pred_region
      %105 = vsyncadd [#allocation12], 0
      %s107 = sshll.u32 %s10, 4
      %s108 = int_to_ptr.hbm [resolvable:$true] %s107
      %s109 = sshll.u32 [#allocation13], 4
      %s110 = int_to_ptr.vmem [resolvable:$true] %s109
      %112 = dma.hbm_to_vmem [thread:$0]  %s108, 64, %s110, [#allocation12]
    $region45: #{tpu_custom_call.1} parent=1 // pred_fallthru
      _
    // Predicated region
    $region46: #{tpu_custom_call.1} parent=1 // pred_check
      _
    $region47: #{tpu_custom_call.1} parent=1 // pred_check_branch
      %114 = sbr.rel (0) target = $region49
    $region48: #{tpu_custom_call.1} parent=1 // pred_region
      _
    $region49: #{tpu_custom_call.1} parent=1 // pred_fallthru
      _
    // Predicated region
    $region50: #{tpu_custom_call.1} parent=1 // pred_check
      _
    $region51: #{tpu_custom_call.1} parent=1 // pred_check_branch
      %116 = sbr.rel (0) target = $region53
    $region52: #{tpu_custom_call.1} parent=1 // pred_region
      %118 = dma.done [#allocation3], 256
    $region53: #{tpu_custom_call.1} parent=1 // pred_fallthru
      _
    // Predicated region
    $region54: #{tpu_custom_call.1} parent=1 // pred_check
      _
    $region55: #{tpu_custom_call.1} parent=1 // pred_check_branch
      %120 = sbr.rel (0) target = $region57
    $region56: #{tpu_custom_call.1} parent=1 // pred_region
      %122 = dma.done [#allocation6], 1024
    $region57: #{tpu_custom_call.1} parent=1 // pred_fallthru
      _
    // Predicated region
    $region58: #{tpu_custom_call.1} parent=1 // pred_check
      _
    $region59: #{tpu_custom_call.1} parent=1 // pred_check_branch
      %124 = sbr.rel (0) target = $region61
    $region60: #{tpu_custom_call.1} parent=1 // pred_region
      %126 = dma.done [#allocation6], 1024
    $region61: #{tpu_custom_call.1} parent=1 // pred_fallthru
      _
    // Predicated region
    $region62: #{tpu_custom_call.1} parent=1 // pred_check
      _
    $region63: #{tpu_custom_call.1} parent=1 // pred_check_branch
      %128 = sbr.rel (0) target = $region65
    $region64: #{tpu_custom_call.1} parent=1 // pred_region
      %130 = dma.done [#allocation9], 16
    $region65: #{tpu_custom_call.1} parent=1 // pred_fallthru
      _
    // Predicated region
    $region66: #{tpu_custom_call.1} parent=1 // pred_check
      _
    $region67: #{tpu_custom_call.1} parent=1 // pred_check_branch
      %132 = sbr.rel (0) target = $region69
    $region68: #{tpu_custom_call.1} parent=1 // pred_region
      %134 = dma.done [#allocation9], 64
    $region69: #{tpu_custom_call.1} parent=1 // pred_fallthru
      _
    // Predicated region
    $region70: #{tpu_custom_call.1} parent=1 // pred_check
      _
    $region71: #{tpu_custom_call.1} parent=1 // pred_check_branch
      %136 = sbr.rel (0) target = $region73
    $region72: #{tpu_custom_call.1} parent=1 // pred_region
      %138 = dma.done [#allocation12], 32
    $region73: #{tpu_custom_call.1} parent=1 // pred_fallthru
      _
    // Predicated region
    $region74: #{tpu_custom_call.1} parent=1 // pred_check
      _
    $region75: #{tpu_custom_call.1} parent=1 // pred_check_branch
      %140 = sbr.rel (0) target = $region77
    $region76: #{tpu_custom_call.1} parent=1 // pred_region
      %142 = dma.done [#allocation12], 64
    $region77: #{tpu_custom_call.1} parent=1 // pred_fallthru
      _
    %v143 = vld [vmem:[%s0] sm:$0xf]
    %v144 = vld [vmem:[%s0 + $0x4] sm:$0xf]
    %v145 = vld [vmem:[#allocation2] sm:$0xf]
    %v146 = vld [vmem:[#allocation2 + $0x4] sm:$0xf]
    %v147 = vld [vmem:[#allocation2 + $0x8] sm:$0xf]
    %v148 = vld [vmem:[#allocation2 + $0xc] sm:$0xf]
    %v149 = vld [vmem:[#allocation5] sm:$0xf]
    %v150 = vld [vmem:[#allocation5 + $0x4] sm:$0xf]
    %v151 = vld [vmem:[#allocation5 + $0x8] sm:$0xf]
    %v152 = vld [vmem:[#allocation5 + $0xc] sm:$0xf]
    %v153 = vld [vmem:[#allocation5 + $0x10] sm:$0xf]
    %v154 = vld [vmem:[#allocation5 + $0x14] sm:$0xf]
    %v155 = vld [vmem:[#allocation5 + $0x18] sm:$0xf]
    %v156 = vld [vmem:[#allocation5 + $0x1c] sm:$0xf]
    %v157 = vld [vmem:[#allocation5 + $0x20] sm:$0xf]
    %v158 = vld [vmem:[#allocation5 + $0x24] sm:$0xf]
    %v159 = vld [vmem:[#allocation5 + $0x28] sm:$0xf]
    %v160 = vld [vmem:[#allocation5 + $0x2c] sm:$0xf]
    %v161 = vld [vmem:[#allocation5 + $0x30] sm:$0xf]
    %v162 = vld [vmem:[#allocation5 + $0x34] sm:$0xf]
    %v163 = vld [vmem:[#allocation5 + $0x38] sm:$0xf]
    %v164 = vld [vmem:[#allocation5 + $0x3c] sm:$0xf]
    %v165 = vld [vmem:[%s3] sm:$0x1]
    %v167 = vperm.slane %v165, 0
    %v171 = vunpack.c.l.b16 %v143
    %v172 = vunpack.c.l.b16 %v144
    %v173 = vpack.c.b16 %v172, %v171
    %v191 = vunpack.c.l.b16 %v149
    %v192 = vunpack.c.l.b16 %v150
    %v193 = vunpack.c.l.b16 %v151
    %v194 = vunpack.c.l.b16 %v152
    %v195 = vunpack.c.l.b16 %v153
    %v196 = vunpack.c.l.b16 %v154
    %v197 = vunpack.c.l.b16 %v155
    %v198 = vunpack.c.l.b16 %v156
    %v199 = vunpack.c.l.b16 %v157
    %v200 = vunpack.c.l.b16 %v158
    %v201 = vunpack.c.l.b16 %v159
    %v202 = vunpack.c.l.b16 %v160
    %v203 = vunpack.c.l.b16 %v161
    %v204 = vunpack.c.l.b16 %v162
    %v205 = vunpack.c.l.b16 %v163
    %v206 = vunpack.c.l.b16 %v164
    %v207 = vpack.c.b16 %v192, %v191
    %v208 = vpack.c.b16 %v194, %v193
    %v209 = vpack.c.b16 %v196, %v195
    %v210 = vpack.c.b16 %v198, %v197
    %v211 = vpack.c.b16 %v200, %v199
    %v212 = vpack.c.b16 %v202, %v201
    %v213 = vpack.c.b16 %v204, %v203
    %v214 = vpack.c.b16 %v206, %v205
    %223 = vmatpush.bf16.msra.mxu0 %v214
    %224 = vmatpush.bf16.msra.mxu0 %v213
    %225 = vmatpush.bf16.msra.mxu0 %v212
    %226 = vmatpush.bf16.msra.mxu0 %v211
    %227 = vmatpush.bf16.msra.mxu0 %v210
    %228 = vmatpush.bf16.msra.mxu0 %v209
    %229 = vmatpush.bf16.msra.mxu0 %v208
    %230 = vmatpush.bf16.msra.mxu0 %v207
    %231 = vmatmul.bf16.gmra.mxu0 %v173
    %v232 = vpop.f32.mrf.mxu0
    %v233 = vadd.f32 %v167, %v232
    %v234 = vpop.f32.mrf.mxu0
    %v235 = vadd.f32 %v167, %v234
    %236 = vdwg.mxu0
    %v237 = vpack.c.bf16 %v233, %v233
    %v238 = vpack.c.bf16 %v235, %v235
    %v239 = vld [vmem:[#allocation7] sm:$0xf]
    %v240 = vld [vmem:[#allocation7 + $0x4] sm:$0xf]
    %v241 = vld [vmem:[#allocation7 + $0x8] sm:$0xf]
    %v242 = vld [vmem:[#allocation7 + $0xc] sm:$0xf]
    %v243 = vld [vmem:[#allocation7 + $0x10] sm:$0xf]
    %v244 = vld [vmem:[#allocation7 + $0x14] sm:$0xf]
    %v245 = vld [vmem:[#allocation7 + $0x18] sm:$0xf]
    %v246 = vld [vmem:[#allocation7 + $0x1c] sm:$0xf]
    %v247 = vld [vmem:[#allocation7 + $0x20] sm:$0xf]
    %v248 = vld [vmem:[#allocation7 + $0x24] sm:$0xf]
    %v249 = vld [vmem:[#allocation7 + $0x28] sm:$0xf]
    %v250 = vld [vmem:[#allocation7 + $0x2c] sm:$0xf]
    %v251 = vld [vmem:[#allocation7 + $0x30] sm:$0xf]
    %v252 = vld [vmem:[#allocation7 + $0x34] sm:$0xf]
    %v253 = vld [vmem:[#allocation7 + $0x38] sm:$0xf]
    %v254 = vld [vmem:[#allocation7 + $0x3c] sm:$0xf]
    %v255 = vld [vmem:[#allocation8] sm:$0x1]
    %v257 = vperm.slane %v255, 0
    %v263 = vunpack.c.l.b16 %v145
    %v264 = vunpack.c.l.b16 %v146
    %v265 = vunpack.c.l.b16 %v147
    %v266 = vunpack.c.l.b16 %v148
    %v267 = vpack.c.b16 %v264, %v263
    %v268 = vpack.c.b16 %v266, %v265
    %v287 = vunpack.c.l.b16 %v239
    %v288 = vunpack.c.l.b16 %v240
    %v289 = vunpack.c.l.b16 %v241
    %v290 = vunpack.c.l.b16 %v242
    %v291 = vunpack.c.l.b16 %v243
    %v292 = vunpack.c.l.b16 %v244
    %v293 = vunpack.c.l.b16 %v245
    %v294 = vunpack.c.l.b16 %v246
    %v295 = vunpack.c.l.b16 %v247
    %v296 = vunpack.c.l.b16 %v248
    %v297 = vunpack.c.l.b16 %v249
    %v298 = vunpack.c.l.b16 %v250
    %v299 = vunpack.c.l.b16 %v251
    %v300 = vunpack.c.l.b16 %v252
    %v301 = vunpack.c.l.b16 %v253
    %v302 = vunpack.c.l.b16 %v254
    %v303 = vpack.c.b16 %v288, %v287
    %v304 = vpack.c.b16 %v290, %v289
    %v305 = vpack.c.b16 %v292, %v291
    %v306 = vpack.c.b16 %v294, %v293
    %v307 = vpack.c.b16 %v296, %v295
    %v308 = vpack.c.b16 %v298, %v297
    %v309 = vpack.c.b16 %v300, %v299
    %v310 = vpack.c.b16 %v302, %v301
    %319 = vmatpush.bf16.msra.mxu0 %v310
    %320 = vmatpush.bf16.msra.mxu0 %v309
    %321 = vmatpush.bf16.msra.mxu0 %v308
    %322 = vmatpush.bf16.msra.mxu0 %v307
    %323 = vmatpush.bf16.msra.mxu0 %v306
    %324 = vmatpush.bf16.msra.mxu0 %v305
    %325 = vmatpush.bf16.msra.mxu0 %v304
    %326 = vmatpush.bf16.msra.mxu0 %v303
    %327 = vmatmul.bf16.gmra.mxu0 %v267
    %v328 = vpop.f32.mrf.mxu0
    %v329 = vadd.f32 %v257, %v328
    %v330 = vpop.f32.mrf.mxu0
    %v331 = vadd.f32 %v257, %v330
    %332 = vmatmul.bf16.gmra.mxu0 %v268
    %v333 = vpop.f32.mrf.mxu0
    %v334 = vadd.f32 %v257, %v333
    %v335 = vpop.f32.mrf.mxu0
    %v336 = vadd.f32 %v257, %v335
    %337 = vdwg.mxu0
    %v338 = vperm.slane %v329, 0
    %v339 = vperm.slane %v334, 0
    %v340 = vsub.f32 %v329, %v338
    %v341 = vsub.f32 %v331, %v338
    %v342 = vsub.f32 %v334, %v339
    %v343 = vsub.f32 %v336, %v339
    %v344 = vpack.c.bf16 %v340, %v340
    %v345 = vpack.c.bf16 %v341, %v341
    %v346 = vpack.c.bf16 %v342, %v342
    %v347 = vpack.c.bf16 %v343, %v343
    %v348 = vld [vmem:[#allocation10] sm:$0xf]
    %v350 = vrot.slane %v348, 3
    %vm351 = vcmask 1040384
    %v354 = vsel %vm351, %v348, %v350
    %vm356 = vcmask 1041409
    %v357 = vsel %vm356, %v348, %v350
    %v359 = vrot.slane %v357, 1
    %vm360 = vcmask 1042434
    %v361 = vsel %vm360, %v348, %v350
    %v363 = vrot.slane %v361, 2
    %vm364 = vcmask 1043459
    %v365 = vsel %vm364, %v348, %v350
    %v367 = vrot.slane %v365, 3
    %v368 = vunpack.i.l.s16 %v354
    %v369 = vunpack.i.h.s16 %v354
    %v370 = vunpack.i.l.s16 %v359
    %v371 = vunpack.i.h.s16 %v359
    %v372 = vunpack.i.l.s16 %v363
    %v373 = vunpack.i.h.s16 %v363
    %v374 = vunpack.i.l.s16 %v367
    %v375 = vunpack.i.h.s16 %v367
    %v376 = vpack.i.b16 %v368, %v368
    %v377 = vpack.i.b16 %v369, %v369
    %v378 = vpack.i.b16 %v370, %v370
    %v379 = vpack.i.b16 %v371, %v371
    %v380 = vpack.i.b16 %v372, %v372
    %v381 = vpack.i.b16 %v373, %v373
    %v382 = vpack.i.b16 %v374, %v374
    %v383 = vpack.i.b16 %v375, %v375
    %v384 = vperm.slane %v376, 0
    %v385 = vperm.slane %v377, 0
    %v386 = vperm.slane %v378, 0
    %v387 = vperm.slane %v379, 0
    %v388 = vperm.slane %v380, 0
    %v389 = vperm.slane %v381, 0
    %v390 = vperm.slane %v382, 0
    %v391 = vperm.slane %v383, 0
    %v393 = vpack.i.b16 %v384, %v384
    %v395 = vperm.slane %v393, 0
    %v397 = vpack.i.b16 %v385, %v385
    %v399 = vperm.slane %v397, 0
    %v401 = vpack.i.b16 %v386, %v386
    %v403 = vperm.slane %v401, 0
    %v405 = vpack.i.b16 %v387, %v387
    %v407 = vperm.slane %v405, 0
    %v409 = vpack.i.b16 %v388, %v388
    %v411 = vperm.slane %v409, 0
    %v413 = vpack.i.b16 %v389, %v389
    %v415 = vperm.slane %v413, 0
    %v417 = vpack.i.b16 %v390, %v390
    %v419 = vperm.slane %v417, 0
    %v421 = vpack.i.b16 %v391, %v391
    %v423 = vperm.slane %v421, 0
    %v424 = vunpack.c.l.bf16 %v344
    %v425 = vunpack.c.l.bf16 %v345
    %v426 = vunpack.c.l.bf16 %v346
    %v427 = vunpack.c.l.bf16 %v347
    %v428 = vunpack.c.l.bf16 %v395
    %v429 = vunpack.c.l.bf16 %v399
    %v430 = vunpack.c.l.bf16 %v403
    %v431 = vunpack.c.l.bf16 %v407
    %v432 = vunpack.c.l.bf16 %v411
    %v433 = vunpack.c.l.bf16 %v415
    %v434 = vunpack.c.l.bf16 %v419
    %v435 = vunpack.c.l.bf16 %v423
    %v436 = vmul.f32 %v424, %v428
    %v437 = vmul.f32 %v425, %v428
    %v438 = vmul.f32 %v424, %v429
    %v439 = vmul.f32 %v425, %v429
    %v440 = vmul.f32 %v424, %v430
    %v441 = vmul.f32 %v425, %v430
    %v442 = vmul.f32 %v424, %v431
    %v443 = vmul.f32 %v425, %v431
    %v444 = vmul.f32 %v424, %v432
    %v445 = vmul.f32 %v425, %v432
    %v446 = vmul.f32 %v424, %v433
    %v447 = vmul.f32 %v425, %v433
    %v448 = vmul.f32 %v424, %v434
    %v449 = vmul.f32 %v425, %v434
    %v450 = vmul.f32 %v424, %v435
    %v451 = vmul.f32 %v425, %v435
    %v452 = vmul.f32 %v426, %v428
    %v453 = vmul.f32 %v427, %v428
    %v454 = vmul.f32 %v426, %v429
    %v455 = vmul.f32 %v427, %v429
    %v456 = vmul.f32 %v426, %v430
    %v457 = vmul.f32 %v427, %v430
    %v458 = vmul.f32 %v426, %v431
    %v459 = vmul.f32 %v427, %v431
    %v460 = vmul.f32 %v426, %v432
    %v461 = vmul.f32 %v427, %v432
    %v462 = vmul.f32 %v426, %v433
    %v463 = vmul.f32 %v427, %v433
    %v464 = vmul.f32 %v426, %v434
    %v465 = vmul.f32 %v427, %v434
    %v466 = vmul.f32 %v426, %v435
    %v467 = vmul.f32 %v427, %v435
    %v468 = vpack.c.bf16 %v436, %v436
    %v469 = vpack.c.bf16 %v437, %v437
    %v470 = vpack.c.bf16 %v438, %v438
    %v471 = vpack.c.bf16 %v439, %v439
    %v472 = vpack.c.bf16 %v440, %v440
    %v473 = vpack.c.bf16 %v441, %v441
    %v474 = vpack.c.bf16 %v442, %v442
    %v475 = vpack.c.bf16 %v443, %v443
    %v476 = vpack.c.bf16 %v444, %v444
    %v477 = vpack.c.bf16 %v445, %v445
    %v478 = vpack.c.bf16 %v446, %v446
    %v479 = vpack.c.bf16 %v447, %v447
    %v480 = vpack.c.bf16 %v448, %v448
    %v481 = vpack.c.bf16 %v449, %v449
    %v482 = vpack.c.bf16 %v450, %v450
    %v483 = vpack.c.bf16 %v451, %v451
    %v484 = vpack.c.bf16 %v452, %v452
    %v485 = vpack.c.bf16 %v453, %v453
    %v486 = vpack.c.bf16 %v454, %v454
    %v487 = vpack.c.bf16 %v455, %v455
    %v488 = vpack.c.bf16 %v456, %v456
    %v489 = vpack.c.bf16 %v457, %v457
    %v490 = vpack.c.bf16 %v458, %v458
    %v491 = vpack.c.bf16 %v459, %v459
    %v492 = vpack.c.bf16 %v460, %v460
    %v493 = vpack.c.bf16 %v461, %v461
    %v494 = vpack.c.bf16 %v462, %v462
    %v495 = vpack.c.bf16 %v463, %v463
    %v496 = vpack.c.bf16 %v464, %v464
    %v497 = vpack.c.bf16 %v465, %v465
    %v498 = vpack.c.bf16 %v466, %v466
    %v499 = vpack.c.bf16 %v467, %v467
    %v516 = vunpack.c.l.b16 %v468
    %v517 = vunpack.c.l.b16 %v469
    %v518 = vunpack.c.l.b16 %v470
    %v519 = vunpack.c.l.b16 %v471
    %v520 = vunpack.c.l.b16 %v472
    %v521 = vunpack.c.l.b16 %v473
    %v522 = vunpack.c.l.b16 %v474
    %v523 = vunpack.c.l.b16 %v475
    %v524 = vunpack.c.l.b16 %v476
    %v525 = vunpack.c.l.b16 %v477
    %v526 = vunpack.c.l.b16 %v478
    %v527 = vunpack.c.l.b16 %v479
    %v528 = vunpack.c.l.b16 %v480
    %v529 = vunpack.c.l.b16 %v481
    %v530 = vunpack.c.l.b16 %v482
    %v531 = vunpack.c.l.b16 %v483
    %v532 = vpack.c.b16 %v517, %v516
    %v533 = vpack.c.b16 %v519, %v518
    %v534 = vpack.c.b16 %v521, %v520
    %v535 = vpack.c.b16 %v523, %v522
    %v536 = vpack.c.b16 %v525, %v524
    %v537 = vpack.c.b16 %v527, %v526
    %v538 = vpack.c.b16 %v529, %v528
    %v539 = vpack.c.b16 %v531, %v530
    %548 = vmatpush.bf16.xpose.msra.mxu0 %v539
    %549 = vmatpush.bf16.xpose.msra.mxu0 %v538
    %550 = vmatpush.bf16.xpose.msra.mxu0 %v537
    %551 = vmatpush.bf16.xpose.msra.mxu0 %v536
    %552 = vmatpush.bf16.xpose.msra.mxu0 %v535
    %553 = vmatpush.bf16.xpose.msra.mxu0 %v534
    %554 = vmatpush.bf16.xpose.msra.mxu0 %v533
    %555 = vmatpush.bf16.xpose.msra.mxu0 %v532
    %556 = vmatmul.bf16.gmra.mxu0 %v237
    %v557 = vpop.f32.mrf.mxu0
    %v558 = vadd.f32 0.0, %v557
    %v559 = vpop.f32.mrf.mxu0
    %560 = vdwg.mxu0
    %v577 = vunpack.c.l.b16 %v484
    %v578 = vunpack.c.l.b16 %v485
    %v579 = vunpack.c.l.b16 %v486
    %v580 = vunpack.c.l.b16 %v487
    %v581 = vunpack.c.l.b16 %v488
    %v582 = vunpack.c.l.b16 %v489
    %v583 = vunpack.c.l.b16 %v490
    %v584 = vunpack.c.l.b16 %v491
    %v585 = vunpack.c.l.b16 %v492
    %v586 = vunpack.c.l.b16 %v493
    %v587 = vunpack.c.l.b16 %v494
    %v588 = vunpack.c.l.b16 %v495
    %v589 = vunpack.c.l.b16 %v496
    %v590 = vunpack.c.l.b16 %v497
    %v591 = vunpack.c.l.b16 %v498
    %v592 = vunpack.c.l.b16 %v499
    %v593 = vpack.c.b16 %v578, %v577
    %v594 = vpack.c.b16 %v580, %v579
    %v595 = vpack.c.b16 %v582, %v581
    %v596 = vpack.c.b16 %v584, %v583
    %v597 = vpack.c.b16 %v586, %v585
    %v598 = vpack.c.b16 %v588, %v587
    %v599 = vpack.c.b16 %v590, %v589
    %v600 = vpack.c.b16 %v592, %v591
    %609 = vmatpush.bf16.xpose.msra.mxu0 %v600
    %610 = vmatpush.bf16.xpose.msra.mxu0 %v599
    %611 = vmatpush.bf16.xpose.msra.mxu0 %v598
    %612 = vmatpush.bf16.xpose.msra.mxu0 %v597
    %613 = vmatpush.bf16.xpose.msra.mxu0 %v596
    %614 = vmatpush.bf16.xpose.msra.mxu0 %v595
    %615 = vmatpush.bf16.xpose.msra.mxu0 %v594
    %616 = vmatpush.bf16.xpose.msra.mxu0 %v593
    %617 = vmatmul.bf16.gmra.mxu0 %v238
    %v618 = vpop.f32.mrf.mxu0
    %v619 = vadd.f32 0.0, %v618
    %v620 = vpop.f32.mrf.mxu0
    %621 = vdwg.mxu0
    %v622 = vmul.f32 %v558, 1.442695
    %v623 = vpow.pop %v622
    %v624 = vmul.f32 %v619, 1.442695
    %v625 = vpow.pop %v624
    %v626 = vld [vmem:[%s7] sm:$0xff]
    %v627 = vld [vmem:[%s7 + $0x8] sm:$0xff]
    %v628 = vld [vmem:[%s7 + $0x10] sm:$0xff]
    %v629 = vld [vmem:[%s7 + $0x18] sm:$0xff]
    %v630 = vld [vmem:[%s7 + $0x20] sm:$0xff]
    %v631 = vld [vmem:[%s7 + $0x28] sm:$0xff]
    %v632 = vld [vmem:[%s7 + $0x30] sm:$0xff]
    %v633 = vld [vmem:[%s7 + $0x38] sm:$0xff]
    %v634 = vld [vmem:[%s7 + $0x40] sm:$0xff]
    %v635 = vld [vmem:[%s7 + $0x48] sm:$0xff]
    %v636 = vld [vmem:[%s7 + $0x50] sm:$0xff]
    %v637 = vld [vmem:[%s7 + $0x58] sm:$0xff]
    %v638 = vld [vmem:[%s7 + $0x60] sm:$0xff]
    %v639 = vld [vmem:[%s7 + $0x68] sm:$0xff]
    %v640 = vld [vmem:[%s7 + $0x70] sm:$0xff]
    %v641 = vld [vmem:[%s7 + $0x78] sm:$0xff]
    %642 = vmatpush.msra.mxu0 %v641
    %643 = vmatpush.msra.mxu0 %v640
    %644 = vmatpush.msra.mxu0 %v639
    %645 = vmatpush.msra.mxu0 %v638
    %646 = vmatpush.msra.mxu0 %v637
    %647 = vmatpush.msra.mxu0 %v636
    %648 = vmatpush.msra.mxu0 %v635
    %649 = vmatpush.msra.mxu0 %v634
    %650 = vmatpush.msra.mxu0 %v633
    %651 = vmatpush.msra.mxu0 %v632
    %652 = vmatpush.msra.mxu0 %v631
    %653 = vmatpush.msra.mxu0 %v630
    %654 = vmatpush.msra.mxu0 %v629
    %655 = vmatpush.msra.mxu0 %v628
    %656 = vmatpush.msra.mxu0 %v627
    %657 = vmatpush.msra.mxu0 %v626
    %658 = vmatmul.f32.gmra.mxu0 %v623
    %v659 = vpop.f32.mrf.mxu0
    %v660 = vadd.f32 0.0, %v659
    %661 = vmatmul.f32.gmra.mxu0 %v625
    %v662 = vpop.f32.mrf.mxu0
    %v663 = vadd.f32 0.0, %v662
    %664 = vdwg.mxu0
    %v665 = vrcp.pop %v660
    %v666 = vrcp.pop %v663
    %vm667 = vcmask 64512
    %v668 = vsel %vm667, %v665, 0.0
    %669 = vadd.xlane.f32.xlu0 %v668
    %v670 = vpop.xlane.xlu0 %669
    %v671 = vsel %vm667, %v666, 0.0
    %672 = vadd.xlane.f32.xlu0 %v671
    %v673 = vpop.xlane.xlu0 %672
    %v674 = vmul.f32 %v670, 0.125
    %v675 = vmul.f32 %v673, 0.125
    %v676 = vunpack.c.l.bf16 %v143
    %v677 = vunpack.c.l.bf16 %v144
    %v678 = vmul.f32 %v674, %v676
    %v679 = vmul.f32 %v675, %v677
    %v680 = vrot.slane %v678, 4
    %v681 = vadd.f32 %v678, %v680
    %v682 = vrot.slane %v681, 2
    %v683 = vadd.f32 %v681, %v682
    %v684 = vrot.slane %v683, 1
    %v685 = vadd.f32 %v683, %v684
    %v686 = vrot.slane %v679, 4
    %v687 = vadd.f32 %v679, %v686
    %v688 = vrot.slane %v687, 2
    %v689 = vadd.f32 %v687, %v688
    %v690 = vrot.slane %v689, 1
    %v691 = vadd.f32 %v689, %v690
    %v692 = vpack.c.bf16 %v685, %v685
    %v693 = vpack.c.bf16 %v691, %v691
    %v694 = vld [vmem:[%s8] sm:$0xff]
    %v695 = vld [vmem:[%s8 + $0x8] sm:$0xff]
    %v696 = vld [vmem:[%s8 + $0x10] sm:$0xff]
    %v697 = vld [vmem:[%s8 + $0x18] sm:$0xff]
    %v698 = vld [vmem:[%s8 + $0x20] sm:$0xff]
    %v699 = vld [vmem:[%s8 + $0x28] sm:$0xff]
    %v700 = vld [vmem:[%s8 + $0x30] sm:$0xff]
    %v701 = vld [vmem:[%s8 + $0x38] sm:$0xff]
    %v702 = vld [vmem:[%s8 + $0x40] sm:$0xff]
    %v703 = vld [vmem:[%s8 + $0x48] sm:$0xff]
    %v704 = vld [vmem:[%s8 + $0x50] sm:$0xff]
    %v705 = vld [vmem:[%s8 + $0x58] sm:$0xff]
    %v706 = vld [vmem:[%s8 + $0x60] sm:$0xff]
    %v707 = vld [vmem:[%s8 + $0x68] sm:$0xff]
    %v708 = vld [vmem:[%s8 + $0x70] sm:$0xff]
    %v709 = vld [vmem:[%s8 + $0x78] sm:$0xff]
    %v710 = vld [vmem:[#allocation11] sm:$0x3]
    %v712 = vperm.slane %v710, 0
    %v713 = vperm.slane %v710, 1
    %v718 = vunpack.c.l.b16 %v692
    %v719 = vunpack.c.l.b16 %v693
    %v720 = vsel %vm356, %v719, %v718
    %v721 = vpack.c.b16 %v720, %v720
    %v739 = vunpack.c.l.b16 %v694
    %v740 = vunpack.c.h.b16 %v694
    %v741 = vunpack.c.l.b16 %v695
    %v742 = vunpack.c.h.b16 %v695
    %v743 = vunpack.c.l.b16 %v696
    %v744 = vunpack.c.h.b16 %v696
    %v745 = vunpack.c.l.b16 %v697
    %v746 = vunpack.c.h.b16 %v697
    %v747 = vunpack.c.l.b16 %v698
    %v748 = vunpack.c.h.b16 %v698
    %v749 = vunpack.c.l.b16 %v699
    %v750 = vunpack.c.h.b16 %v699
    %v751 = vunpack.c.l.b16 %v700
    %v752 = vunpack.c.h.b16 %v700
    %v753 = vunpack.c.l.b16 %v701
    %v754 = vunpack.c.h.b16 %v701
    %v755 = vunpack.c.l.b16 %v702
    %v756 = vunpack.c.h.b16 %v702
    %v757 = vunpack.c.l.b16 %v703
    %v758 = vunpack.c.h.b16 %v703
    %v759 = vunpack.c.l.b16 %v704
    %v760 = vunpack.c.h.b16 %v704
    %v761 = vunpack.c.l.b16 %v705
    %v762 = vunpack.c.h.b16 %v705
    %v763 = vunpack.c.l.b16 %v706
    %v764 = vunpack.c.h.b16 %v706
    %v765 = vunpack.c.l.b16 %v707
    %v766 = vunpack.c.h.b16 %v707
    %v767 = vunpack.c.l.b16 %v708
    %v768 = vunpack.c.h.b16 %v708
    %v769 = vunpack.c.l.b16 %v709
    %v770 = vunpack.c.h.b16 %v709
    %v771 = vpack.c.b16 %v741, %v739
    %v772 = vpack.c.b16 %v742, %v740
    %v773 = vpack.c.b16 %v745, %v743
    %v774 = vpack.c.b16 %v746, %v744
    %v775 = vpack.c.b16 %v749, %v747
    %v776 = vpack.c.b16 %v750, %v748
    %v777 = vpack.c.b16 %v753, %v751
    %v778 = vpack.c.b16 %v754, %v752
    %v779 = vpack.c.b16 %v757, %v755
    %v780 = vpack.c.b16 %v758, %v756
    %v781 = vpack.c.b16 %v761, %v759
    %v782 = vpack.c.b16 %v762, %v760
    %v783 = vpack.c.b16 %v765, %v763
    %v784 = vpack.c.b16 %v766, %v764
    %v785 = vpack.c.b16 %v769, %v767
    %v786 = vpack.c.b16 %v770, %v768
    %803 = vmatpush.bf16.msra.mxu0 %v785
    %804 = vmatpush.bf16.msra.mxu0 %v783
    %805 = vmatpush.bf16.msra.mxu0 %v781
    %806 = vmatpush.bf16.msra.mxu0 %v779
    %807 = vmatpush.bf16.msra.mxu0 %v777
    %808 = vmatpush.bf16.msra.mxu0 %v775
    %809 = vmatpush.bf16.msra.mxu0 %v773
    %810 = vmatpush.bf16.msra.mxu0 %v771
    %811 = vmatmul.bf16.gmra.mxu0 %v721
    %v812 = vpop.f32.mrf.mxu0
    %v813 = vadd.f32 %v712, %v812
    %v814 = vpop.f32.mrf.mxu0
    %815 = vdwg.mxu0
    %816 = vmatpush.bf16.msra.mxu0 %v786
    %817 = vmatpush.bf16.msra.mxu0 %v784
    %818 = vmatpush.bf16.msra.mxu0 %v782
    %819 = vmatpush.bf16.msra.mxu0 %v780
    %820 = vmatpush.bf16.msra.mxu0 %v778
    %821 = vmatpush.bf16.msra.mxu0 %v776
    %822 = vmatpush.bf16.msra.mxu0 %v774
    %823 = vmatpush.bf16.msra.mxu0 %v772
    %824 = vmatmul.bf16.gmra.mxu0 %v721
    %v825 = vpop.f32.mrf.mxu0
    %v826 = vadd.f32 %v713, %v825
    %v827 = vpop.f32.mrf.mxu0
    %828 = vdwg.mxu0
    %v829 = vmul.f32 %v813, 0.5
    %v830 = vmul.f32 %v826, 0.5
    %v831 = vmul.f32 %v813, 0.70710677
    %v832 = vmul.f32 %v826, 0.70710677
    %v833 = vand.u32 2147483647, %v831
    %v834 = vand.u32 2147483647, %v832
    %v835 = vmul.f32 %v833, 0.3275911
    %v836 = vmul.f32 %v834, 0.3275911
    %v837 = vadd.f32 %v835, 1.0
    %v838 = vadd.f32 %v836, 1.0
    %v839 = vrcp.pop %v837
    %v840 = vmul.f32 %v837, %v839
    %v841 = vsub.f32 1.0, %v840
    %v842 = vmul.f32 %v839, %v841
    %v843 = vadd.f32 %v839, %v842
    %vm844 = vweird.f32 %v837
    %vm845 = vweird.f32 %v839
    %vm846 = vmor %vm844, %vm845
    %v847 = vsel %vm846, %v839, %v843
    %v848 = vand.u32 2147483647, %v837
    %vm849 = vcmp.eq.f32.partialorder %v848, 8.507059e+37
    %v850 = vand.u32 %v837, 2147483648
    %v851 = vor.u32 1.1754944e-38, %v850
    %v852 = vsel %vm849, %v851, %v847
    %v853 = vmul.f32 1.0, %v852
    %v854 = vrcp.pop %v838
    %v855 = vmul.f32 %v838, %v854
    %v856 = vsub.f32 1.0, %v855
    %v857 = vmul.f32 %v854, %v856
    %v858 = vadd.f32 %v854, %v857
    %vm859 = vweird.f32 %v838
    %vm860 = vweird.f32 %v854
    %vm861 = vmor %vm859, %vm860
    %v862 = vsel %vm861, %v854, %v858
    %v863 = vand.u32 2147483647, %v838
    %vm864 = vcmp.eq.f32.partialorder %v863, 8.507059e+37
    %v865 = vand.u32 %v838, 2147483648
    %v866 = vor.u32 1.1754944e-38, %v865
    %v867 = vsel %vm864, %v866, %v862
    %v868 = vmul.f32 1.0, %v867
    %v869 = vmul.f32 %v853, 1.0614054
    %v870 = vmul.f32 %v868, 1.0614054
    %v871 = vadd.f32 %v869, -1.4531521
    %v872 = vadd.f32 %v870, -1.4531521
    %v873 = vmul.f32 %v871, %v853
    %v874 = vmul.f32 %v872, %v868
    %v875 = vadd.f32 %v873, 1.4214138
    %v876 = vadd.f32 %v874, 1.4214138
    %v877 = vmul.f32 %v875, %v853
    %v878 = vmul.f32 %v876, %v868
    %v879 = vadd.f32 %v877, -0.28449672
    %v880 = vadd.f32 %v878, -0.28449672
    %v881 = vmul.f32 %v879, %v853
    %v882 = vmul.f32 %v880, %v868
    %v883 = vadd.f32 %v881, 0.2548296
    %v884 = vadd.f32 %v882, 0.2548296
    %v885 = vmul.f32 %v883, %v853
    %v886 = vmul.f32 %v884, %v868
    %v887 = vsub.f32 0.0, %v833
    %v888 = vsub.f32 0.0, %v834
    %v889 = vmul.f32 %v887, %v833
    %v890 = vmul.f32 %v888, %v834
    %v891 = vmul.f32 %v889, 1.442695
    %v892 = vpow.pop %v891
    %v893 = vmul.f32 %v890, 1.442695
    %v894 = vpow.pop %v893
    %v895 = vmul.f32 %v885, %v892
    %v896 = vmul.f32 %v886, %v894
    %v897 = vsub.f32 1.0, %v895
    %v898 = vsub.f32 1.0, %v896
    %vm899 = vcmp.lt.f32.partialorder %v831, 0.0
    %vm900 = vcmp.lt.f32.partialorder %v832, 0.0
    %v901 = vsub.f32 0.0, %v897
    %v902 = vsub.f32 0.0, %v898
    %v903 = vsel %vm899, %v901, %v897
    %v904 = vsel %vm900, %v902, %v898
    %v905 = vadd.f32 %v903, 1.0
    %v906 = vadd.f32 %v904, 1.0
    %v907 = vmul.f32 %v829, %v905
    %v908 = vmul.f32 %v830, %v906
    %v909 = vld [vmem:[#allocation13] sm:$0xf]
    %v910 = vld [vmem:[%s11] sm:$0x3]
    %912 = vset.pattern.permute.xlu0 0
    %913 = vperm.xlu0 %912, %v910
    %v914 = vpop.permute.xlu0 %913
    %917 = vst [vmem:[#allocation1] ss:$4 sm:$0xff] %v909
    %v918 = vld.sshfl [vmem:[#allocation1] sm:$0xff pattern:$0x73625140]
    %v919 = vld.sshfl [vmem:[#allocation1 + $0x8] sm:$0xff pattern:$0x73625140]
    %922 = vmatpush.xpose.msra.mxu0 0.0
    %923 = vmatpush.xpose.msra.mxu0 0.0
    %924 = vmatpush.xpose.msra.mxu0 0.0
    %925 = vmatpush.xpose.msra.mxu0 0.0
    %926 = vmatpush.xpose.msra.mxu0 0.0
    %927 = vmatpush.xpose.msra.mxu0 0.0
    %928 = vmatpush.xpose.msra.mxu0 0.0
    %929 = vmatpush.xpose.msra.mxu0 0.0
    %930 = vmatpush.xpose.msra.mxu0 0.0
    %931 = vmatpush.xpose.msra.mxu0 0.0
    %932 = vmatpush.xpose.msra.mxu0 0.0
    %933 = vmatpush.xpose.msra.mxu0 0.0
    %934 = vmatpush.xpose.msra.mxu0 0.0
    %935 = vmatpush.xpose.msra.mxu0 0.0
    %936 = vmatpush.xpose.msra.mxu0 0.0
    %937 = vmatpush.xpose.msra.mxu0 %v907
    %938 = vmatmul.f32.gmra.mxu0 %v918
    %v939 = vpop.f32.mrf.mxu0
    %v940 = vadd.f32 %v914, %v939
    %941 = vdwg.mxu0
    %942 = vmatpush.xpose.msra.mxu0 0.0
    %943 = vmatpush.xpose.msra.mxu0 0.0
    %944 = vmatpush.xpose.msra.mxu0 0.0
    %945 = vmatpush.xpose.msra.mxu0 0.0
    %946 = vmatpush.xpose.msra.mxu0 0.0
    %947 = vmatpush.xpose.msra.mxu0 0.0
    %948 = vmatpush.xpose.msra.mxu0 0.0
    %949 = vmatpush.xpose.msra.mxu0 0.0
    %950 = vmatpush.xpose.msra.mxu0 0.0
    %951 = vmatpush.xpose.msra.mxu0 0.0
    %952 = vmatpush.xpose.msra.mxu0 0.0
    %953 = vmatpush.xpose.msra.mxu0 0.0
    %954 = vmatpush.xpose.msra.mxu0 0.0
    %955 = vmatpush.xpose.msra.mxu0 0.0
    %956 = vmatpush.xpose.msra.mxu0 0.0
    %957 = vmatpush.xpose.msra.mxu0 %v908
    %958 = vmatmul.f32.gmra.mxu0 %v919
    %v959 = vpop.f32.mrf.mxu0
    %v960 = vadd.f32 %v940, %v959
    %961 = vdwg.mxu0
    %v962 = vmax.f32 %v960, 0.0
    %vm963 = vcmask 9216
    %964 = vst.msk [vmem:[#allocation14] sm:$0x3] %vm963, %v962
    // Predicated region
    $region78: #{tpu_custom_call.1} parent=1 // pred_check
      _
    $region79: #{tpu_custom_call.1} parent=1 // pred_check_branch
      %966 = sbr.rel (0) target = $region81
    $region80: #{tpu_custom_call.1} parent=1 // pred_region
      %968 = vsyncadd [#allocation4], 0
      %s970 = sshll.u32 [#allocation14], 4
      %s971 = int_to_ptr.vmem [resolvable:$true] %s970
      %s972 = sshll.u32 %s12, 4
      %s973 = int_to_ptr.hbm [resolvable:$true] %s972
      %975 = dma.vmem_to_hbm [thread:$0]  %s971, 32, %s973, [#allocation4]
    $region81: #{tpu_custom_call.1} parent=1 // pred_fallthru
      _
    // Predicated region
    $region82: #{tpu_custom_call.1} parent=1 // pred_check
      _
    $region83: #{tpu_custom_call.1} parent=1 // pred_check_branch
      %977 = sbr.rel (0) target = $region85
    $region84: #{tpu_custom_call.1} parent=1 // pred_region
      %979 = dma.done [#allocation4], 32
    $region85: #{tpu_custom_call.1} parent=1 // pred_fallthru
      _
    %980 = vsyncpa [#allocation3], 1
    %981 = vsyncpa [#allocation6], 1
    %982 = vsyncpa [#allocation9], 1
    %983 = vsyncpa [#allocation12], 1
    %984 = vsyncpa [#allocation4], 1

</llo_original>
